<compile_context>
chip_gen: v5e
topology: v5e:2x2
jax: 0.10.0
libtpu: 0.0.40
codegen_flags: <defaults>
</compile_context>

<pallas_src>
import functools

import jax
import jax.numpy as jnp
import numpy as np
from jax import lax
from jax.experimental import pallas as pl
from jax.experimental.pallas import tpu as pltpu

LN_EPS = 1e-6
MASK_VALUE = -1e30
VMEM_LIMIT = 32 * 1024 * 1024  # safe on v5e / v6e (128MiB phys) and v7x (64MiB)


def _round_up(x, m):
    return ((x + m - 1) // m) * m


def _pick_tile(dim, preferred, align):
    """Largest tile <= preferred (multiple of align) that divides dim."""
    if dim <= preferred:
        return dim
    t = (preferred // align) * align
    while t >= align:
        if dim % t == 0:
            return t
        t -= align
    return dim


# --------------- Fused LayerNorm1 + QKV projection + RoPE(Q,K) ---------------
def _ln_qkv_rope_kernel(x_ref, g_ref, bln_ref, w_ref, b_ref,
                        cos_ref, sa_ref, sb_ref, o_ref, n_scr,
                        *, half, qk_blocks, tile_n):
    j = pl.program_id(1)

    # LayerNorm once per row tile, cached in VMEM for all output-N tiles.
    @pl.when(j == 0)
    def _():
        x = x_ref[...].astype(jnp.float32)
        mu = jnp.mean(x, axis=-1, keepdims=True)
        var = jnp.mean((x - mu) ** 2, axis=-1, keepdims=True)
        n = (x - mu) * lax.rsqrt(var + LN_EPS)
        n_scr[...] = (n * g_ref[...] + bln_ref[...]).astype(n_scr.dtype)

    # MXU matmul in compute dtype, f32 accumulation (softmax scale pre-folded
    # into the Q weight columns at the wrapper level).
    y = jnp.dot(n_scr[...], w_ref[...], preferred_element_type=jnp.float32)
    y = y + b_ref[...]

    # Q / K head tiles: whole-block RoPE via two XLU rolls + sign-folded sin
    # tables (no per-head slicing, no concatenate).  Cross-head / padded-lane
    # contamination is zeroed by the precomputed sin masks.
    @pl.when(j < qk_blocks)
    def _():
        rot = (pltpu.roll(y, half, axis=1) * sa_ref[...]
               + pltpu.roll(y, tile_n - half, axis=1) * sb_ref[...])
        o_ref[...] = (y * cos_ref[...] + rot).astype(o_ref.dtype)

    # V head tiles: plain projection.
    @pl.when(j >= qk_blocks)
    def _():
        o_ref[...] = y.astype(o_ref.dtype)


def ln_qkv_rope(x, gamma, beta, w, b, cos_h, sin_a_h, sin_b_h,
                *, num_heads, hd_pad, half, tm):
    S_pad, D = x.shape
    N = w.shape[1]                              # 3 * H * hd_pad
    # Heads per N-tile: keep TN <= 512 and head/section boundaries tile-aligned.
    g_heads = max(1, min(num_heads, 512 // hd_pad))
    while num_heads % g_heads:
        g_heads -= 1
    TN = g_heads * hd_pad
    qk_blocks = (2 * num_heads * hd_pad) // TN  # tiles that need RoPE (Q + K)

    cos_t = jnp.tile(cos_h, (1, g_heads))
    sa_t = jnp.tile(sin_a_h, (1, g_heads))
    sb_t = jnp.tile(sin_b_h, (1, g_heads))
    g2 = gamma.reshape(1, D).astype(jnp.float32)
    be2 = beta.reshape(1, D).astype(jnp.float32)
    b2 = b.reshape(1, N).astype(jnp.float32)

    kernel = functools.partial(_ln_qkv_rope_kernel, half=half,
                               qk_blocks=qk_blocks, tile_n=TN)
    return pl.pallas_call(
        kernel,
        out_shape=jax.ShapeDtypeStruct((S_pad, N), x.dtype),
        grid=(S_pad // tm, N // TN),
        in_specs=[
            pl.BlockSpec((tm, D), lambda i, j: (i, 0)),
            pl.BlockSpec((1, D), lambda i, j: (0, 0)),
            pl.BlockSpec((1, D), lambda i, j: (0, 0)),
            pl.BlockSpec((D, TN), lambda i, j: (0, j)),
            pl.BlockSpec((1, TN), lambda i, j: (0, j)),
            pl.BlockSpec((tm, TN), lambda i, j: (i, 0)),
            pl.BlockSpec((tm, TN), lambda i, j: (i, 0)),
            pl.BlockSpec((tm, TN), lambda i, j: (i, 0)),
        ],
        out_specs=pl.BlockSpec((tm, TN), lambda i, j: (i, j)),
        scratch_shapes=[pltpu.VMEM((tm, D), x.dtype)],
        compiler_params=pltpu.CompilerParams(
            dimension_semantics=("parallel", "arbitrary"),
            vmem_limit_bytes=VMEM_LIMIT),
    )(x, g2, be2, w, b2, cos_t, sa_t, sb_t)


# ------------------- Fused LayerNorm + Linear (+activation) ------------------
def _ln_linear_kernel(x_ref, g_ref, bln_ref, w_ref, b_ref, o_ref, n_scr,
                      *, activation):
    @pl.when(pl.program_id(1) == 0)
    def _():
        x = x_ref[...].astype(jnp.float32)
        mu = jnp.mean(x, axis=-1, keepdims=True)
        var = jnp.mean((x - mu) ** 2, axis=-1, keepdims=True)
        n = (x - mu) * lax.rsqrt(var + LN_EPS)
        n_scr[...] = (n * g_ref[...] + bln_ref[...]).astype(n_scr.dtype)

    y = jnp.dot(n_scr[...], w_ref[...], preferred_element_type=jnp.float32)
    y = y + b_ref[...]
    if activation == "quick_gelu":
        y = y * jax.nn.sigmoid(1.702 * y)
    o_ref[...] = y.astype(o_ref.dtype)


def ln_linear(x, gamma, beta, w, b, *, tm, activation=None):
    S_pad, D = x.shape
    N = w.shape[1]
    TN = _pick_tile(N, 512, 128)
    g2 = gamma.reshape(1, D).astype(jnp.float32)
    be2 = beta.reshape(1, D).astype(jnp.float32)
    b2 = b.reshape(1, N).astype(jnp.float32)
    kernel = functools.partial(_ln_linear_kernel, activation=activation)
    return pl.pallas_call(
        kernel,
        out_shape=jax.ShapeDtypeStruct((S_pad, N), x.dtype),
        grid=(S_pad // tm, N // TN),
        in_specs=[
            pl.BlockSpec((tm, D), lambda i, j: (i, 0)),
            pl.BlockSpec((1, D), lambda i, j: (0, 0)),
            pl.BlockSpec((1, D), lambda i, j: (0, 0)),
            pl.BlockSpec((D, TN), lambda i, j: (0, j)),
            pl.BlockSpec((1, TN), lambda i, j: (0, j)),
        ],
        out_specs=pl.BlockSpec((tm, TN), lambda i, j: (i, j)),
        scratch_shapes=[pltpu.VMEM((tm, D), x.dtype)],
        compiler_params=pltpu.CompilerParams(
            dimension_semantics=("parallel", "arbitrary"),
            vmem_limit_bytes=VMEM_LIMIT),
    )(x, g2, be2, w, b2)


# -------------------- Linear + bias + residual (full-K) ----------------------
def _linear_residual_kernel(x_ref, w_ref, b_ref, r_ref, o_ref):
    y = jnp.dot(x_ref[...], w_ref[...], preferred_element_type=jnp.float32)
    y = y + b_ref[...] + r_ref[...].astype(jnp.float32)
    o_ref[...] = y.astype(o_ref.dtype)


def linear_residual(x, w, b, residual, *, tm):
    S_pad, K = x.shape
    N = w.shape[1]
    TN = _pick_tile(N, 512, 128)
    b2 = b.reshape(1, N).astype(jnp.float32)
    return pl.pallas_call(
        _linear_residual_kernel,
        out_shape=jax.ShapeDtypeStruct((S_pad, N), residual.dtype),
        grid=(S_pad // tm, N // TN),
        in_specs=[
            pl.BlockSpec((tm, K), lambda i, j: (i, 0)),
            pl.BlockSpec((K, TN), lambda i, j: (0, j)),
            pl.BlockSpec((1, TN), lambda i, j: (0, j)),
            pl.BlockSpec((tm, TN), lambda i, j: (i, j)),
        ],
        out_specs=pl.BlockSpec((tm, TN), lambda i, j: (i, j)),
        compiler_params=pltpu.CompilerParams(
            dimension_semantics=("parallel", "parallel"),
            vmem_limit_bytes=VMEM_LIMIT),
    )(x, w, b2, residual)


# ----------------------- Flash attention (online softmax) --------------------
def _flash_attn_kernel(lo_ref, hi_ref, segq_ref, segk_ref, q_ref, k_ref, v_ref,
                       o_ref, m_sc, l_sc, acc_sc):
    qi = pl.program_id(1)
    ki = pl.program_id(2)

    @pl.when(ki == 0)
    def _():
        m_sc[...] = jnp.full(m_sc.shape, MASK_VALUE, jnp.float32)
        l_sc[...] = jnp.zeros(l_sc.shape, jnp.float32)
        acc_sc[...] = jnp.zeros(acc_sc.shape, jnp.float32)

    # Skip all compute for kv tiles outside this q-tile's segment range
    # (their DMA is already elided by the clamped index_map).
    in_range = jnp.logical_and(ki >= lo_ref[qi], ki < hi_ref[qi])

    @pl.when(in_range)
    def _():
        q = q_ref[...]                              # (TQ, HD_P), scale pre-folded
        k = k_ref[...]                              # (TKV, HD_P)
        v = v_ref[...]                              # (TKV, HD_P)
        s = lax.dot_general(q, k, (((1,), (1,)), ((), ())),
                            preferred_element_type=jnp.float32)
        # Block-diagonal mask from per-token segment ids, built in-kernel.
        mask = segq_ref[...] == segk_ref[...]       # (TQ,1)==(1,TKV) -> (TQ,TKV)
        s = jnp.where(mask, s, MASK_VALUE)
        m_prev = m_sc[...]
        m_new = jnp.maximum(m_prev, jnp.max(s, axis=-1, keepdims=True))
        alpha = jnp.exp(m_prev - m_new)
        # Keep the mask on p: q rows whose segment has no keys in this kv tile
        # must contribute nothing even when their running max is still MASK_VALUE.
        p = jnp.where(mask, jnp.exp(s - m_new), 0.0)
        l_sc[...] = alpha * l_sc[...] + jnp.sum(p, axis=-1, keepdims=True)
        acc_sc[...] = alpha * acc_sc[...] + jnp.dot(
            p.astype(v.dtype), v, preferred_element_type=jnp.float32)
        m_sc[...] = m_new

    @pl.when(ki == pl.num_programs(2) - 1)
    def _():
        l = jnp.maximum(l_sc[...], 1e-20)
        o_ref[...] = (acc_sc[...] / l).astype(o_ref.dtype)


def flash_attention(qkv, seg, kv_lo, kv_hi, *, num_heads, hd_pad, tq, tkv):
    """qkv: [S_pad, 3*H*HD_P] (Q|K|V sections, head_dim padded, RoPE applied)."""
    S_pad = qkv.shape[0]
    H = num_heads
    nq = S_pad // tq
    nk = S_pad // tkv
    seg_col = seg.reshape(S_pad, 1)
    seg_row = seg.reshape(1, S_pad)

    def kv_block(qi, ki, lo_ref, hi_ref):
        # Clamp into the valid range: out-of-range steps keep the resident block.
        return jnp.maximum(lo_ref[qi], jnp.minimum(ki, hi_ref[qi] - 1))

    return pl.pallas_call(
        _flash_attn_kernel,
        out_shape=jax.ShapeDtypeStruct((S_pad, H * hd_pad), qkv.dtype),
        grid_spec=pltpu.PrefetchScalarGridSpec(
            num_scalar_prefetch=2,
            grid=(H, nq, nk),
            in_specs=[
                pl.BlockSpec((tq, 1), lambda h, qi, ki, lo, hi: (qi, 0)),
                pl.BlockSpec((1, tkv),
                             lambda h, qi, ki, lo, hi: (0, kv_block(qi, ki, lo, hi))),
                pl.BlockSpec((tq, hd_pad), lambda h, qi, ki, lo, hi: (qi, h)),
                pl.BlockSpec((tkv, hd_pad),
                             lambda h, qi, ki, lo, hi: (kv_block(qi, ki, lo, hi), H + h)),
                pl.BlockSpec((tkv, hd_pad),
                             lambda h, qi, ki, lo, hi: (kv_block(qi, ki, lo, hi), 2 * H + h)),
            ],
            out_specs=pl.BlockSpec((tq, hd_pad), lambda h, qi, ki, lo, hi: (qi, h)),
            scratch_shapes=[
                pltpu.VMEM((tq, 1), jnp.float32),
                pltpu.VMEM((tq, 1), jnp.float32),
                pltpu.VMEM((tq, hd_pad), jnp.float32),
            ]),
        compiler_params=pltpu.CompilerParams(
            dimension_semantics=("parallel", "parallel", "arbitrary"),
            vmem_limit_bytes=VMEM_LIMIT),
    )(kv_lo, kv_hi, seg_col, seg_row, qkv, qkv, qkv)


# ------------------------------- Block forward -------------------------------
def qwen2vl_vision_block(hidden_states, cu_seqlens, cos, sin, params, *,
                         num_heads, compute_dtype=None):
    """Qwen2VLVisionBlock forward.  hidden_states [S, D], cos/sin [S, rotary_dim]."""
    S, D = hidden_states.shape
    H = num_heads
    hd = D // H
    rd = cos.shape[-1]
    half = rd // 2
    HD_P = _round_up(hd, 128)                  # lane-aligned padded head_dim
    scale = 1.0 / np.sqrt(hd)

    cdt = compute_dtype if compute_dtype is not None else hidden_states.dtype

    # ---- sequence padding / tile selection (ragged vision lengths) ----
    if S <= 256:
        S_pad = _round_up(S, 8)
        TM = TQ = TKV = S_pad
    else:
        S_pad = _round_up(S, 512)
        TM = TQ = 256
        TKV = 512

    x = hidden_states.astype(cdt)
    if S_pad != S:
        x = jnp.pad(x, ((0, S_pad - S), (0, 0)))

    # ---- one-time parameter repacking: pad head_dim -> HD_P, fold scale into Q ----
    def pad_head_cols(w):                      # (..., H*hd) -> (..., H*HD_P)
        lead = w.shape[:-1]
        w = w.reshape(lead + (H, hd))
        w = jnp.pad(w, [(0, 0)] * len(lead) + [(0, 0), (0, HD_P - hd)])
        return w.reshape(lead + (H * HD_P,))

    qkv_w = params["qkv_w"].astype(jnp.float32)
    qkv_b = params["qkv_b"].astype(jnp.float32)
    wq, wk, wv = qkv_w[:, :D], qkv_w[:, D:2 * D], qkv_w[:, 2 * D:]
    bq, bk, bv = qkv_b[:D], qkv_b[D:2 * D], qkv_b[2 * D:]
    qkv_w_p = jnp.concatenate(
        [pad_head_cols(wq * scale), pad_head_cols(wk), pad_head_cols(wv)],
        axis=-1).astype(cdt)
    qkv_b_p = jnp.concatenate(
        [pad_head_cols((bq * scale)[None, :])[0],
         pad_head_cols(bk[None, :])[0],
         pad_head_cols(bv[None, :])[0]], axis=-1)

    proj_w_p = jnp.pad(params["proj_w"].astype(jnp.float32).reshape(H, hd, D),
                       ((0, 0), (0, HD_P - hd), (0, 0))
                       ).reshape(H * HD_P, D).astype(cdt)
    fc1_w = params["fc1_w"].astype(cdt)
    fc2_w = params["fc2_w"].astype(cdt)

    # ---- rotary tables, per-head width HD_P (pass-through lanes: cos=1, sin=0) ----
    cos_h = jnp.ones((S_pad, HD_P), jnp.float32).at[:S, :rd].set(
        cos.astype(jnp.float32))
    sin_h = jnp.zeros((S_pad, HD_P), jnp.float32).at[:S, :rd].set(
        sin.astype(jnp.float32))
    lane = jnp.arange(HD_P)
    sin_a_h = jnp.where((lane >= half) & (lane < rd), sin_h, 0.0)   # * y[j-half]
    sin_b_h = jnp.where(lane < half, -sin_h, 0.0)                   # * y[j+half]

    # ---- segment ids (pad tokens get their own segment) + kv-tile ranges ----
    cu = cu_seqlens.astype(jnp.int32)
    pos = jnp.arange(S_pad, dtype=jnp.int32)
    seg = jnp.sum(pos[:, None] >= cu[None, 1:], axis=-1).astype(jnp.int32)
    cu_full = jnp.concatenate([cu, jnp.array([S_pad], jnp.int32)])
    nq = S_pad // TQ
    q_start = jnp.arange(nq, dtype=jnp.int32) * TQ
    seg_lo = seg[q_start]
    seg_hi = seg[q_start + (TQ - 1)]
    kv_lo = (cu_full[seg_lo] // TKV).astype(jnp.int32)
    kv_hi = ((cu_full[seg_hi + 1] + (TKV - 1)) // TKV).astype(jnp.int32)

    residual = x

    # Fused LN1 + QKV matmul + RoPE(Q,K) -> [S_pad, 3*H*HD_P].
    qkv = ln_qkv_rope(x, params["norm1_g"], params["norm1_b"], qkv_w_p, qkv_b_p,
                      cos_h, sin_a_h, sin_b_h,
                      num_heads=H, hd_pad=HD_P, half=half, tm=TM)

    # Flash attention, block-diag mask + prefetch-driven kv-tile range skipping.
    attn = flash_attention(qkv, seg, kv_lo, kv_hi,
                           num_heads=H, hd_pad=HD_P, tq=TQ, tkv=TKV)

    # Fused proj + residual add (full-K matmul on padded heads).
    h = linear_residual(attn, proj_w_p, params["proj_b"], residual, tm=TM)

    # Fused LN2 + FC1 + quick_gelu, then fused FC2 + residual add.
    h1 = ln_linear(h, params["norm2_g"], params["norm2_b"], fc1_w,
                   params["fc1_b"], tm=TM, activation="quick_gelu")
    out = linear_residual(h1, fc2_w, params["fc2_b"], h, tm=TM)
    return out[:S]


# ------------------------------ Pure-JAX reference ---------------------------
def _reference(hidden_states, cu_seqlens, cos, sin, params, *, num_heads):
    S, D = hidden_states.shape
    hd = D // num_heads
    rd = cos.shape[-1]
    scale = 1.0 / np.sqrt(hd)

    def ln(x, g, b):
        mu = jnp.mean(x, -1, keepdims=True)
        var = jnp.mean((x - mu) ** 2, -1, keepdims=True)
        return (x - mu) * jax.lax.rsqrt(var + LN_EPS) * g + b

    def rope(x, cos, sin):
        half = rd // 2
        rot = jnp.concatenate([-x[..., half:rd], x[..., :half]], axis=-1)
        xr = x[..., :rd] * cos[:, None, :] + rot * sin[:, None, :]
        return jnp.concatenate([xr, x[..., rd:]], axis=-1)

    res = hidden_states
    n1 = ln(hidden_states, params["norm1_g"], params["norm1_b"])
    qkv = n1 @ params["qkv_w"] + params["qkv_b"]
    q = rope(qkv[:, :D].reshape(S, num_heads, hd), cos, sin)
    k = rope(qkv[:, D:2 * D].reshape(S, num_heads, hd), cos, sin)
    v = qkv[:, 2 * D:].reshape(S, num_heads, hd)
    pos = jnp.arange(S)
    seg = jnp.sum(pos[:, None] >= cu_seqlens[None, 1:-1], axis=-1)
    bias = jnp.where(seg[:, None] == seg[None, :], 0.0, MASK_VALUE)
    s = jnp.einsum("qhd,khd->hqk", q, k) * scale + bias[None]
    p = jax.nn.softmax(s, axis=-1)
    o = jnp.einsum("hqk,khd->qhd", p, v).reshape(S, D)
    attn_out = o @ params["proj_w"] + params["proj_b"]
    h = attn_out + res
    n2 = ln(h, params["norm2_g"], params["norm2_b"])
    x1 = n2 @ params["fc1_w"] + params["fc1_b"]
    x1 = x1 * jax.nn.sigmoid(1.702 * x1)
    x2 = x1 @ params["fc2_w"] + params["fc2_b"]
    return h + x2


# ------------------------------------ Main ------------------------------------
def _make_params(key, D, D_MLP):
    keys = jax.random.split(key, 12)
    return {
        "norm1_g": 1.0 + 0.02 * jax.random.normal(keys[0], (D,), jnp.float32),
        "norm1_b": 0.02 * jax.random.normal(keys[1], (D,), jnp.float32),
        "norm2_g": 1.0 + 0.02 * jax.random.normal(keys[2], (D,), jnp.float32),
        "norm2_b": 0.02 * jax.random.normal(keys[3], (D,), jnp.float32),
        "qkv_w": 0.05 * jax.random.normal(keys[4], (D, 3 * D), jnp.float32),
        "qkv_b": 0.05 * jax.random.normal(keys[5], (3 * D,), jnp.float32),
        "proj_w": 0.05 * jax.random.normal(keys[6], (D, D), jnp.float32),
        "proj_b": 0.05 * jax.random.normal(keys[7], (D,), jnp.float32),
        "fc1_w": 0.05 * jax.random.normal(keys[8], (D, D_MLP), jnp.float32),
        "fc1_b": 0.05 * jax.random.normal(keys[9], (D_MLP,), jnp.float32),
        "fc2_w": 0.05 * jax.random.normal(keys[10], (D_MLP, D), jnp.float32),
        "fc2_b": 0.05 * jax.random.normal(keys[11], (D,), jnp.float32),
    }


def _make_rotary(S, hd):
    # NeoX-style: freqs duplicated across both halves, rotary_dim == head_dim.
    inv_freq = 1.0 / (10000.0 ** (np.arange(0, hd // 2) / (hd // 2)))
    freqs = np.outer(np.arange(S), inv_freq)            # [S, hd/2]
    emb = np.concatenate([freqs, freqs], axis=-1)       # [S, hd]
    return (jnp.asarray(np.cos(emb), jnp.float32),
            jnp.asarray(np.sin(emb), jnp.float32))


if __name__ == "__main__":
    # ---- small config: full-dim blocks, f32 and bf16 paths ----
    S, D, H, D_MLP = 16, 32, 4, 64
    hd = D // H
    params = _make_params(jax.random.PRNGKey(0), D, D_MLP)
    x = jax.random.normal(jax.random.PRNGKey(42), (S, D), jnp.float32)
    cu = jnp.array([0, 10, 16], dtype=jnp.int32)         # two segments
    cos, sin = _make_rotary(S, hd)

    out = qwen2vl_vision_block(x, cu, cos, sin, params, num_heads=H)
    out = jax.block_until_ready(out)
    ref = _reference(x, cu, cos, sin, params, num_heads=H)
    np.testing.assert_allclose(np.asarray(out), np.asarray(ref),
                               rtol=5e-3, atol=5e-3)

    out_bf16 = qwen2vl_vision_block(x, cu, cos, sin, params, num_heads=H,
                                    compute_dtype=jnp.bfloat16)
    out_bf16 = jax.block_until_ready(out_bf16)
    np.testing.assert_allclose(np.asarray(out_bf16.astype(jnp.float32)),
                               np.asarray(ref), rtol=1e-1, atol=1e-1)

    # ---- medium config: exercises row/col tiling, S padding, pad-token
    #      segment, head padding and kv-tile range skipping ----
    S2, D2, H2, D_MLP2 = 640, 256, 4, 512
    hd2 = D2 // H2
    params2 = _make_params(jax.random.PRNGKey(1), D2, D_MLP2)
    x2 = jax.random.normal(jax.random.PRNGKey(7), (S2, D2), jnp.float32)
    cu2 = jnp.array([0, 300, 640], dtype=jnp.int32)
    cos2, sin2 = _make_rotary(S2, hd2)

    out2 = qwen2vl_vision_block(x2, cu2, cos2, sin2, params2, num_heads=H2)
    out2 = jax.block_until_ready(out2)
    ref2 = _reference(x2, cu2, cos2, sin2, params2, num_heads=H2)
    np.testing.assert_allclose(np.asarray(out2), np.asarray(ref2),
                               rtol=2e-2, atol=2e-2)

    print("KERNEL_OK")
</pallas_src>

<mosaic_0001>
module attributes {stable_mosaic.version = 11 : i64} {
  func.func @_ln_qkv_rope_kernel(%arg0: i32, %arg1: i32, %arg2: memref<16x32xf32, #tpu.memory_space<vmem>>, %arg3: memref<1x32xf32, #tpu.memory_space<vmem>>, %arg4: memref<1x32xf32, #tpu.memory_space<vmem>>, %arg5: memref<32x512xf32, #tpu.memory_space<vmem>>, %arg6: memref<1x512xf32, #tpu.memory_space<vmem>>, %arg7: memref<16x512xf32, #tpu.memory_space<vmem>>, %arg8: memref<16x512xf32, #tpu.memory_space<vmem>>, %arg9: memref<16x512xf32, #tpu.memory_space<vmem>>, %arg10: memref<16x512xf32, #tpu.memory_space<vmem>>, %arg11: memref<16x32xf32, #tpu.memory_space<vmem>>) attributes {dimension_semantics = [#tpu.dimension_semantics<parallel>, #tpu.dimension_semantics<arbitrary>], iteration_bounds = array<i64: 1, 3>, scalar_prefetch = 0 : i64, scratch_operands = 1 : i64, tpu.core_type = #tpu.core_type<tc>, window_params = [{transform_indices = @transform_0, window_bounds = array<i64: 16, 32>}, {pipeline_mode = #tpu.pipeline_mode<synchronous>, transform_indices = @transform_1, window_bounds = array<i64: 1, 32>}, {pipeline_mode = #tpu.pipeline_mode<synchronous>, transform_indices = @transform_2, window_bounds = array<i64: 1, 32>}, {transform_indices = @transform_3, window_bounds = array<i64: 32, 512>}, {transform_indices = @transform_4, window_bounds = array<i64: 1, 512>}, {transform_indices = @transform_5, window_bounds = array<i64: 16, 512>}, {transform_indices = @transform_6, window_bounds = array<i64: 16, 512>}, {transform_indices = @transform_7, window_bounds = array<i64: 16, 512>}, {transform_indices = @transform_8, window_bounds = array<i64: 16, 512>}]} {
    %c0_i32 = arith.constant 0 : i32
    %0 = arith.cmpi eq, %arg1, %c0_i32 : i32
    %1 = arith.extui %0 : i1 to i32
    %c0_i32_0 = arith.constant 0 : i32
    %2 = arith.cmpi ne, %1, %c0_i32_0 : i32
    scf.if %2 {
      %c0_9 = arith.constant 0 : index
      %c0_10 = arith.constant 0 : index
      %15 = vector.load %arg2[%c0_9, %c0_10] : memref<16x32xf32, #tpu.memory_space<vmem>>, vector<16x32xf32>
      %cst_11 = arith.constant dense<0.000000e+00> : vector<16xf32>
      %16 = vector.multi_reduction <add>, %15, %cst_11 [1] : vector<16x32xf32> to vector<16xf32>
      %17 = vector.shape_cast %16 : vector<16xf32> to vector<16x1xf32>
      %cst_12 = arith.constant 3.200000e+01 : f32
      %18 = vector.broadcast %cst_12 : f32 to vector<16x1xf32>
      %19 = arith.divf %17, %18 : vector<16x1xf32>
      %20 = vector.broadcast %19 : vector<16x1xf32> to vector<16x32xf32>
      %21 = arith.subf %15, %20 : vector<16x32xf32>
      %22 = arith.mulf %21, %21 : vector<16x32xf32>
      %cst_13 = arith.constant dense<0.000000e+00> : vector<16xf32>
      %23 = vector.multi_reduction <add>, %22, %cst_13 [1] : vector<16x32xf32> to vector<16xf32>
      %24 = vector.shape_cast %23 : vector<16xf32> to vector<16x1xf32>
      %cst_14 = arith.constant 3.200000e+01 : f32
      %25 = vector.broadcast %cst_14 : f32 to vector<16x1xf32>
      %26 = arith.divf %24, %25 : vector<16x1xf32>
      %27 = vector.broadcast %19 : vector<16x1xf32> to vector<16x32xf32>
      %28 = arith.subf %15, %27 : vector<16x32xf32>
      %cst_15 = arith.constant 9.99999997E-7 : f32
      %29 = vector.broadcast %cst_15 : f32 to vector<16x1xf32>
      %30 = arith.addf %26, %29 : vector<16x1xf32>
      %31 = math.rsqrt %30 : vector<16x1xf32>
      %32 = vector.broadcast %31 : vector<16x1xf32> to vector<16x32xf32>
      %33 = arith.mulf %28, %32 : vector<16x32xf32>
      %c0_16 = arith.constant 0 : index
      %c0_17 = arith.constant 0 : index
      %34 = vector.load %arg3[%c0_16, %c0_17] : memref<1x32xf32, #tpu.memory_space<vmem>>, vector<1x32xf32>
      %35 = vector.broadcast %34 : vector<1x32xf32> to vector<16x32xf32>
      %36 = arith.mulf %33, %35 : vector<16x32xf32>
      %c0_18 = arith.constant 0 : index
      %c0_19 = arith.constant 0 : index
      %37 = vector.load %arg4[%c0_18, %c0_19] : memref<1x32xf32, #tpu.memory_space<vmem>>, vector<1x32xf32>
      %38 = vector.broadcast %37 : vector<1x32xf32> to vector<16x32xf32>
      %39 = arith.addf %36, %38 : vector<16x32xf32>
      %c0_20 = arith.constant 0 : index
      %c0_21 = arith.constant 0 : index
      %40 = vector.load %arg11[%c0_20, %c0_21] : memref<16x32xf32, #tpu.memory_space<vmem>>, vector<16x32xf32>
      tpu.vector_store %arg11[%c0_20, %c0_21], %39 {strides = array<i32>} : memref<16x32xf32, #tpu.memory_space<vmem>>, vector<16x32xf32>,
    } else {
    }
    %c0 = arith.constant 0 : index
    %c0_1 = arith.constant 0 : index
    %3 = vector.load %arg11[%c0, %c0_1] : memref<16x32xf32, #tpu.memory_space<vmem>>, vector<16x32xf32>
    %c0_2 = arith.constant 0 : index
    %c0_3 = arith.constant 0 : index
    %4 = vector.load %arg5[%c0_2, %c0_3] : memref<32x512xf32, #tpu.memory_space<vmem>>, vector<32x512xf32>
    %cst = arith.constant dense<0.000000e+00> : vector<16x512xf32>
    %5 = tpu.matmul %3, %4, %cst {dimension_numbers = #tpu.dot_dimension_numbers<[1], [0], [0], [1], [0, 0, 1, 1], [], []>} : vector<16x32xf32>, vector<32x512xf32>, vector<16x512xf32> -> vector<16x512xf32>
    %c0_4 = arith.constant 0 : index
    %c0_5 = arith.constant 0 : index
    %6 = vector.load %arg6[%c0_4, %c0_5] : memref<1x512xf32, #tpu.memory_space<vmem>>, vector<1x512xf32>
    %7 = vector.broadcast %6 : vector<1x512xf32> to vector<16x512xf32>
    %8 = arith.addf %5, %7 : vector<16x512xf32>
    %c2_i32 = arith.constant 2 : i32
    %9 = arith.cmpi slt, %arg1, %c2_i32 : i32
    %10 = arith.extui %9 : i1 to i32
    %c0_i32_6 = arith.constant 0 : i32
    %11 = arith.cmpi ne, %10, %c0_i32_6 : i32
    scf.if %11 {
      %c4_i32 = arith.constant 4 : i32
      %15 = tpu.dynamic_rotate %8 by %c4_i32 dim 1 : vector<16x512xf32>, i32 -> vector<16x512xf32>
      %c0_9 = arith.constant 0 : index
      %c0_10 = arith.constant 0 : index
      %16 = vector.load %arg8[%c0_9, %c0_10] : memref<16x512xf32, #tpu.memory_space<vmem>>, vector<16x512xf32>
      %17 = arith.mulf %15, %16 : vector<16x512xf32>
      %c508_i32 = arith.constant 508 : i32
      %18 = tpu.dynamic_rotate %8 by %c508_i32 dim 1 : vector<16x512xf32>, i32 -> vector<16x512xf32>
      %c0_11 = arith.constant 0 : index
      %c0_12 = arith.constant 0 : index
      %19 = vector.load %arg9[%c0_11, %c0_12] : memref<16x512xf32, #tpu.memory_space<vmem>>, vector<16x512xf32>
      %20 = arith.mulf %18, %19 : vector<16x512xf32>
      %21 = arith.addf %17, %20 : vector<16x512xf32>
      %c0_13 = arith.constant 0 : index
      %c0_14 = arith.constant 0 : index
      %22 = vector.load %arg7[%c0_13, %c0_14] : memref<16x512xf32, #tpu.memory_space<vmem>>, vector<16x512xf32>
      %23 = arith.mulf %8, %22 : vector<16x512xf32>
      %24 = arith.addf %23, %21 : vector<16x512xf32>
      %c0_15 = arith.constant 0 : index
      %c0_16 = arith.constant 0 : index
      %25 = vector.load %arg10[%c0_15, %c0_16] : memref<16x512xf32, #tpu.memory_space<vmem>>, vector<16x512xf32>
      tpu.vector_store %arg10[%c0_15, %c0_16], %24 {strides = array<i32>} : memref<16x512xf32, #tpu.memory_space<vmem>>, vector<16x512xf32>,
    } else {
    }
    %c2_i32_7 = arith.constant 2 : i32
    %12 = arith.cmpi sge, %arg1, %c2_i32_7 : i32
    %13 = arith.extui %12 : i1 to i32
    %c0_i32_8 = arith.constant 0 : i32
    %14 = arith.cmpi ne, %13, %c0_i32_8 : i32
    scf.if %14 {
      %c0_9 = arith.constant 0 : index
      %c0_10 = arith.constant 0 : index
      %15 = vector.load %arg10[%c0_9, %c0_10] : memref<16x512xf32, #tpu.memory_space<vmem>>, vector<16x512xf32>
      tpu.vector_store %arg10[%c0_9, %c0_10], %8 {strides = array<i32>} : memref<16x512xf32, #tpu.memory_space<vmem>>, vector<16x512xf32>,
    } else {
    }
    return
  }
  func.func @transform_0(%arg0: i32, %arg1: i32) -> (i32, i32) {
    %c0_i32 = arith.constant 0 : i32
    %c0_i32_0 = arith.constant 0 : i32
    return %arg0, %c0_i32 : i32, i32
  }
  func.func @transform_1(%arg0: i32, %arg1: i32) -> (i32, i32) {
    %c0_i32 = arith.constant 0 : i32
    %c0_i32_0 = arith.constant 0 : i32
    %c0_i32_1 = arith.constant 0 : i32
    return %c0_i32, %c0_i32_0 : i32, i32
  }
  func.func @transform_2(%arg0: i32, %arg1: i32) -> (i32, i32) {
    %c0_i32 = arith.constant 0 : i32
    %c0_i32_0 = arith.constant 0 : i32
    %c0_i32_1 = arith.constant 0 : i32
    return %c0_i32, %c0_i32_0 : i32, i32
  }
  func.func @transform_3(%arg0: i32, %arg1: i32) -> (i32, i32) {
    %c0_i32 = arith.constant 0 : i32
    %c0_i32_0 = arith.constant 0 : i32
    return %c0_i32, %arg1 : i32, i32
  }
  func.func @transform_4(%arg0: i32, %arg1: i32) -> (i32, i32) {
    %c0_i32 = arith.constant 0 : i32
    %c0_i32_0 = arith.constant 0 : i32
    return %c0_i32, %arg1 : i32, i32
  }
  func.func @transform_5(%arg0: i32, %arg1: i32) -> (i32, i32) {
    %c0_i32 = arith.constant 0 : i32
    %c0_i32_0 = arith.constant 0 : i32
    return %arg0, %c0_i32 : i32, i32
  }
  func.func @transform_6(%arg0: i32, %arg1: i32) -> (i32, i32) {
    %c0_i32 = arith.constant 0 : i32
    %c0_i32_0 = arith.constant 0 : i32
    return %arg0, %c0_i32 : i32, i32
  }
  func.func @transform_7(%arg0: i32, %arg1: i32) -> (i32, i32) {
    %c0_i32 = arith.constant 0 : i32
    %c0_i32_0 = arith.constant 0 : i32
    return %arg0, %c0_i32 : i32, i32
  }
  func.func @transform_8(%arg0: i32, %arg1: i32) -> (i32, i32) {
    %c0_i32 = arith.constant 0 : i32
    return %arg0, %arg1 : i32, i32
  }
}

</mosaic_0001>

<llo_original>
// kernel: tpu_custom_call.1
$region0: #{tpu_custom_call.1}
  #allocation0 [shape = 'u32[]', space=smem, size = 0x4, offset = 0x4, fixed_abs, tag = 'smem constant byte address 0x4 - core index']
  #allocation1 [shape = 'u32[72,128]{1,0:T(1,128)}', space=vmem, size = 0x9000, scoped, tag = 'internal scratch']
  #allocation2 [shape = 'f32[16,32]{1,0:T(8,128)}', space=vmem, size = 0x2000, scoped, tag = 'scratch operand']
  %s0 = inlined_call_operand.hbm [shape: f32[16,32], index: 0, kind: input, shape index: {}]
  %s1 = inlined_call_operand.hbm [shape: f32[1,32], index: 1, kind: input, shape index: {}]
  %s2 = inlined_call_operand.vmem [shape: f32[1,32], index: 2, kind: input, shape index: {}]
  %s3 = inlined_call_operand.hbm [shape: f32[32,1536], index: 3, kind: input, shape index: {}]
  %s4 = inlined_call_operand.hbm [shape: f32[1,1536], index: 4, kind: input, shape index: {}]
  %s5 = inlined_call_operand.hbm [shape: f32[16,512], index: 5, kind: input, shape index: {}]
  %s6 = inlined_call_operand.hbm [shape: f32[16,512], index: 6, kind: input, shape index: {}]
  %s7 = inlined_call_operand.hbm [shape: f32[16,512], index: 7, kind: input, shape index: {}]
  %s8 = inlined_call_operand.hbm [shape: f32[16,1536], index: 8, kind: output, shape index: {}]
  %s9 = sld [smem:[#allocation0]]
  $region105: #{tpu_custom_call.1} parent=0
    _
  %s11 = ssub.s32 1, %s9
  %s12 = scalar_select 0, %s11, %s9
  $region1: #{tpu_custom_call.1} parent=0
    #allocation3 [shape = 'u8[8192]{0}', space=vmem, size = 0x2000, scoped, tag = 'input window, operand 0, single buffered']
    #allocation4 [shape = 's32[2]{0}', space=sflag, size = 0x8, scoped, tag = 'scoped memory for tpu_custom_call.1']
    #allocation5 [shape = 's32[2]{0}', space=sflag, size = 0x8, scoped, tag = 'scoped memory for tpu_custom_call.1']
    #allocation6 [shape = 'u8[512]{0}', space=vmem, size = 0x400, scoped, tag = 'input window, operand 1, single buffered']
    #allocation7 [shape = 's32[1]{0}', space=sflag, size = 0x4, scoped, tag = 'scoped memory for tpu_custom_call.1']
    #allocation8 [shape = 'u8[131072]{0}', space=vmem, size = 0x20000, scoped, tag = 'input window, operand 3']
    #allocation9 [shape = 'u8[4096]{0}', space=vmem, size = 0x1000, scoped, tag = 'input window, operand 4']
    #allocation10 [shape = 'u8[32768]{0}', space=vmem, size = 0x8000, scoped, tag = 'input window, operand 5, single buffered']
    #allocation11 [shape = 'u8[32768]{0}', space=vmem, size = 0x8000, scoped, tag = 'input window, operand 6, single buffered']
    #allocation12 [shape = 's32[1]{0}', space=sflag, size = 0x4, scoped, tag = 'scoped memory for tpu_custom_call.1']
    #allocation13 [shape = 'u8[32768]{0}', space=vmem, size = 0x8000, scoped, tag = 'input window, operand 7, single buffered']
    #allocation14 [shape = 'u8[65536]{0}', space=vmem, size = 0x10000, scoped, tag = 'output window, operand 0']
    %13 = vsyncpa [#allocation4], 0
    %14 = vsyncpa [#allocation7], 0
    %15 = vsyncpa [#allocation12], 0
    %16 = vsyncpa [#allocation5], 0
    %s17 = scalar_lea.sflag [#allocation5], 1
    %18 = vsyncpa %s17, 0
    loop: start=0, step=1, limit=5
    $region2: #{tpu_custom_call.1} parent=1 // loop_pre_header
      _
    $region3: #{tpu_custom_call.1} parent=1 // loop_header
      %s20 = sphi 0, %s24
      %p21 = scmp.ge.s32.totalorder %s20, 5
      %s27 = sphi 0, %s39
      %s28 = sphi 0, %s35
      %s29 = sphi 0, %s27
      %s30 = sphi 0, %s28
      %s31 = sphi 0, %s29
      %s32 = sphi 0, %s30
      %s42 = sphi 0, %s44
      %s45 = sphi 0, %s42
      %s46 = sphi 0, %s45
      %s62 = sphi 0, %s46
      %s66 = sphi 0, %s66
      %s68 = sphi 0, %s66
      %s69 = sphi 0, %s68
      %s83 = sphi 0, %s69
      %s87 = sphi 0, %s87
      %s89 = sphi 0, %s87
      %s90 = sphi 0, %s89
      %s104 = sphi 0, %s90
      %s110 = sphi 0, %s112
      %s113 = sphi 0, %s110
      %s114 = sphi 0, %s113
      %s130 = sphi 0, %s114
      %s136 = sphi 0, %s138
      %s139 = sphi 0, %s136
      %s140 = sphi 0, %s139
      %s156 = sphi 0, %s140
      %s162 = sphi 0, %s164
      %s165 = sphi 0, %s162
      %s166 = sphi 0, %s165
      %s182 = sphi 0, %s166
      %s188 = sphi 0, %s190
      %s191 = sphi 0, %s188
      %s192 = sphi 0, %s191
      %s208 = sphi 0, %s192
      %s214 = sphi 0, %s216
      %s217 = sphi 0, %s214
      %s218 = sphi 0, %s217
      %s234 = sphi 0, %s218
      %s242 = sphi 0, %s244
      %s245 = sphi 0, %s242
      %s246 = sphi 0, %s245
      %s262 = sphi 0, %s246
    $region4: #{tpu_custom_call.1} parent=1 // loop_header_branch
      %23 = sbr.rel (%p21) target = $region8
    $region5: #{tpu_custom_call.1} parent=1 // loop_body
      %s25 = ssub.s32 %s20, 1
      %s26 = ssub.s32 %s20, 2
      %s33 = sadd.s32 1, %s28
      %p34 = scmp.ge.s32.totalorder %s33, 3
      %s35 = scalar_select %p34, 0, %s33
      %s36 = sadd.s32 1, %s27
      %s37 = scalar_select %p34, %s36, %s27
      %p38 = scmp.ge.s32.totalorder %s37, 1
      %s39 = scalar_select %p38, 0, %s37
      %s40 = ssub.s32 %s27, %s39
      %p41 = scmp.eq.s32.totalorder %s40, 0
      %s43 = sadd.s32 %s42, 1
      %s44 = scalar_select %p41, %s42, %s43
      %p47 = pneg %p41
      %p48 = scmp.eq.s32.totalorder %s20, 2
      %p49 = por %p47, %p48
      %p50 = scmp.ne.s32.totalorder %s42, %s45
      %p51 = scmp.eq.s32.totalorder %s20, 0
      %p52 = por %p50, %p51
      %p53 = scmp.ne.s32.totalorder %s42, %s45
      %p54 = scmp.eq.s32.totalorder %s25, 2
      %p55 = por %p53, %p54
      %p56 = scmp.ne.s32.totalorder %s45, %s46
      %p57 = scmp.eq.s32.totalorder %s25, 0
      %p58 = por %p56, %p57
      %p59 = scmp.ne.s32.totalorder %s45, %s46
      %p60 = scmp.eq.s32.totalorder %s26, 2
      %p61 = por %p59, %p60
      %p63 = scmp.ne.s32.totalorder %s46, %s62
      %p64 = scmp.eq.s32.totalorder %s26, 0
      %p65 = por %p63, %p64
      %s67 = sadd.s32 %s66, 1
      %p70 = scmp.eq.s32.totalorder %s20, 2
      %p71 = scmp.ne.s32.totalorder %s66, %s68
      %p72 = scmp.eq.s32.totalorder %s20, 0
      %p73 = por %p71, %p72
      %p74 = scmp.ne.s32.totalorder %s66, %s68
      %p75 = scmp.eq.s32.totalorder %s25, 2
      %p76 = por %p74, %p75
      %p77 = scmp.ne.s32.totalorder %s68, %s69
      %p78 = scmp.eq.s32.totalorder %s25, 0
      %p79 = por %p77, %p78
      %p80 = scmp.ne.s32.totalorder %s68, %s69
      %p81 = scmp.eq.s32.totalorder %s26, 2
      %p82 = por %p80, %p81
      %p84 = scmp.ne.s32.totalorder %s69, %s83
      %p85 = scmp.eq.s32.totalorder %s26, 0
      %p86 = por %p84, %p85
      %s88 = sadd.s32 %s87, 1
      %p91 = scmp.eq.s32.totalorder %s20, 2
      %p92 = scmp.ne.s32.totalorder %s87, %s89
      %p93 = scmp.eq.s32.totalorder %s20, 0
      %p94 = por %p92, %p93
      %p95 = scmp.ne.s32.totalorder %s87, %s89
      %p96 = scmp.eq.s32.totalorder %s25, 2
      %p97 = por %p95, %p96
      %p98 = scmp.ne.s32.totalorder %s89, %s90
      %p99 = scmp.eq.s32.totalorder %s25, 0
      %p100 = por %p98, %p99
      %p101 = scmp.ne.s32.totalorder %s89, %s90
      %p102 = scmp.eq.s32.totalorder %s26, 2
      %p103 = por %p101, %p102
      %p105 = scmp.ne.s32.totalorder %s90, %s104
      %p106 = scmp.eq.s32.totalorder %s26, 0
      %p107 = por %p105, %p106
      %s108 = ssub.s32 %s28, %s35
      %p109 = scmp.eq.s32.totalorder %s108, 0
      %s111 = sadd.s32 %s110, 1
      %s112 = scalar_select %p109, %s110, %s111
      %p115 = pneg %p109
      %p116 = scmp.eq.s32.totalorder %s20, 2
      %p117 = por %p115, %p116
      %p118 = scmp.ne.s32.totalorder %s110, %s113
      %p119 = scmp.eq.s32.totalorder %s20, 0
      %p120 = por %p118, %p119
      %p121 = scmp.ne.s32.totalorder %s110, %s113
      %p122 = scmp.eq.s32.totalorder %s25, 2
      %p123 = por %p121, %p122
      %p124 = scmp.ne.s32.totalorder %s113, %s114
      %p125 = scmp.eq.s32.totalorder %s25, 0
      %p126 = por %p124, %p125
      %p127 = scmp.ne.s32.totalorder %s113, %s114
      %p128 = scmp.eq.s32.totalorder %s26, 2
      %p129 = por %p127, %p128
      %p131 = scmp.ne.s32.totalorder %s114, %s130
      %p132 = scmp.eq.s32.totalorder %s26, 0
      %p133 = por %p131, %p132
      %s134 = ssub.s32 %s28, %s35
      %p135 = scmp.eq.s32.totalorder %s134, 0
      %s137 = sadd.s32 %s136, 1
      %s138 = scalar_select %p135, %s136, %s137
      %p141 = pneg %p135
      %p142 = scmp.eq.s32.totalorder %s20, 2
      %p143 = por %p141, %p142
      %p144 = scmp.ne.s32.totalorder %s136, %s139
      %p145 = scmp.eq.s32.totalorder %s20, 0
      %p146 = por %p144, %p145
      %p147 = scmp.ne.s32.totalorder %s136, %s139
      %p148 = scmp.eq.s32.totalorder %s25, 2
      %p149 = por %p147, %p148
      %p150 = scmp.ne.s32.totalorder %s139, %s140
      %p151 = scmp.eq.s32.totalorder %s25, 0
      %p152 = por %p150, %p151
      %p153 = scmp.ne.s32.totalorder %s139, %s140
      %p154 = scmp.eq.s32.totalorder %s26, 2
      %p155 = por %p153, %p154
      %p157 = scmp.ne.s32.totalorder %s140, %s156
      %p158 = scmp.eq.s32.totalorder %s26, 0
      %p159 = por %p157, %p158
      %s160 = ssub.s32 %s27, %s39
      %p161 = scmp.eq.s32.totalorder %s160, 0
      %s163 = sadd.s32 %s162, 1
      %s164 = scalar_select %p161, %s162, %s163
      %p167 = pneg %p161
      %p168 = scmp.eq.s32.totalorder %s20, 2
      %p169 = por %p167, %p168
      %p170 = scmp.ne.s32.totalorder %s162, %s165
      %p171 = scmp.eq.s32.totalorder %s20, 0
      %p172 = por %p170, %p171
      %p173 = scmp.ne.s32.totalorder %s162, %s165
      %p174 = scmp.eq.s32.totalorder %s25, 2
      %p175 = por %p173, %p174
      %p176 = scmp.ne.s32.totalorder %s165, %s166
      %p177 = scmp.eq.s32.totalorder %s25, 0
      %p178 = por %p176, %p177
      %p179 = scmp.ne.s32.totalorder %s165, %s166
      %p180 = scmp.eq.s32.totalorder %s26, 2
      %p181 = por %p179, %p180
      %p183 = scmp.ne.s32.totalorder %s166, %s182
      %p184 = scmp.eq.s32.totalorder %s26, 0
      %p185 = por %p183, %p184
      %s186 = ssub.s32 %s27, %s39
      %p187 = scmp.eq.s32.totalorder %s186, 0
      %s189 = sadd.s32 %s188, 1
      %s190 = scalar_select %p187, %s188, %s189
      %p193 = pneg %p187
      %p194 = scmp.eq.s32.totalorder %s20, 2
      %p195 = por %p193, %p194
      %p196 = scmp.ne.s32.totalorder %s188, %s191
      %p197 = scmp.eq.s32.totalorder %s20, 0
      %p198 = por %p196, %p197
      %p199 = scmp.ne.s32.totalorder %s188, %s191
      %p200 = scmp.eq.s32.totalorder %s25, 2
      %p201 = por %p199, %p200
      %p202 = scmp.ne.s32.totalorder %s191, %s192
      %p203 = scmp.eq.s32.totalorder %s25, 0
      %p204 = por %p202, %p203
      %p205 = scmp.ne.s32.totalorder %s191, %s192
      %p206 = scmp.eq.s32.totalorder %s26, 2
      %p207 = por %p205, %p206
      %p209 = scmp.ne.s32.totalorder %s192, %s208
      %p210 = scmp.eq.s32.totalorder %s26, 0
      %p211 = por %p209, %p210
      %s212 = ssub.s32 %s27, %s39
      %p213 = scmp.eq.s32.totalorder %s212, 0
      %s215 = sadd.s32 %s214, 1
      %s216 = scalar_select %p213, %s214, %s215
      %p219 = pneg %p213
      %p220 = scmp.eq.s32.totalorder %s20, 2
      %p221 = por %p219, %p220
      %p222 = scmp.ne.s32.totalorder %s214, %s217
      %p223 = scmp.eq.s32.totalorder %s20, 0
      %p224 = por %p222, %p223
      %p225 = scmp.ne.s32.totalorder %s214, %s217
      %p226 = scmp.eq.s32.totalorder %s25, 2
      %p227 = por %p225, %p226
      %p228 = scmp.ne.s32.totalorder %s217, %s218
      %p229 = scmp.eq.s32.totalorder %s25, 0
      %p230 = por %p228, %p229
      %p231 = scmp.ne.s32.totalorder %s217, %s218
      %p232 = scmp.eq.s32.totalorder %s26, 2
      %p233 = por %p231, %p232
      %p235 = scmp.ne.s32.totalorder %s218, %s234
      %p236 = scmp.eq.s32.totalorder %s26, 0
      %p237 = por %p235, %p236
      %s238 = ssub.s32 %s27, %s39
      %s239 = ssub.s32 %s28, %s35
      %s240 = sor.u32 %s238, %s239
      %p241 = scmp.eq.s32.totalorder %s240, 0
      %s243 = sadd.s32 %s242, 1
      %s244 = scalar_select %p241, %s242, %s243
      %p247 = pneg %p241
      %p248 = scmp.eq.s32.totalorder %s20, 2
      %p249 = por %p247, %p248
      %p250 = scmp.ne.s32.totalorder %s242, %s245
      %p251 = scmp.eq.s32.totalorder %s20, 0
      %p252 = por %p250, %p251
      %p253 = scmp.ne.s32.totalorder %s242, %s245
      %p254 = scmp.eq.s32.totalorder %s25, 2
      %p255 = por %p253, %p254
      %p256 = scmp.ne.s32.totalorder %s245, %s246
      %p257 = scmp.eq.s32.totalorder %s25, 0
      %p258 = por %p256, %p257
      %p259 = scmp.ne.s32.totalorder %s245, %s246
      %p260 = scmp.eq.s32.totalorder %s26, 2
      %p261 = por %p259, %p260
      %p263 = scmp.ne.s32.totalorder %s246, %s262
      %p264 = scmp.eq.s32.totalorder %s26, 0
      %p265 = por %p263, %p264
      %p266 = scmp.le.s32.totalorder 1, %s20
      %p267 = scmp.lt.s32.totalorder %s20, 4
      %p268 = pnand %p266, %p267
      %p269 = pneg %p268
      // Predicated region
      $region9: #{tpu_custom_call.1} parent=5 // pred_check
        _
      $region10: #{tpu_custom_call.1} parent=5 // pred_check_branch
        %271 = sbr.rel (%p268) target = $region12
      $region11: #{tpu_custom_call.1} parent=5 // pred_region
        %s272 = ssub.s32 %s20, 1
        // Predicated region
        $region13: #{tpu_custom_call.1} parent=11 // pred_check
          %p273 = pneg %p58
        $region14: #{tpu_custom_call.1} parent=11 // pred_check_branch
          %275 = sbr.rel (%p273) target = $region16
        $region15: #{tpu_custom_call.1} parent=11 // pred_region
          %s276 = smul.u32 2, %s29
          %278 = vsyncadd [#allocation4], 0
          %s279 = smul.addr %s276, 8
          %s280 = scalar_lea.hbm %s0, %s279
          %s281 = sshll.u32 %s280, 4
          %s282 = int_to_ptr.hbm [resolvable:$true] %s281
          %s283 = sshll.u32 [#allocation3], 4
          %s284 = int_to_ptr.vmem [resolvable:$true] %s283
          %289 = dma.hbm_to_vmem [thread:$0]  %s282, 256, %s284, [#allocation4], 128, 128, 8
        $region16: #{tpu_custom_call.1} parent=11 // pred_fallthru
          _
        // Predicated region
        $region17: #{tpu_custom_call.1} parent=11 // pred_check
          %p290 = pneg %p79
        $region18: #{tpu_custom_call.1} parent=11 // pred_check_branch
          %292 = sbr.rel (%p290) target = $region20
        $region19: #{tpu_custom_call.1} parent=11 // pred_region
          %294 = vsyncadd [#allocation7], 0
          %s296 = sshll.u32 %s1, 4
          %s297 = int_to_ptr.hbm [resolvable:$true] %s296
          %s298 = sshll.u32 [#allocation6], 4
          %s299 = int_to_ptr.vmem [resolvable:$true] %s298
          %301 = dma.hbm_to_vmem [thread:$0]  %s297, 16, %s299, [#allocation7]
        $region20: #{tpu_custom_call.1} parent=11 // pred_fallthru
          _
        // Predicated region
        $region21: #{tpu_custom_call.1} parent=11 // pred_check
          %p302 = pneg %p100
        $region22: #{tpu_custom_call.1} parent=11 // pred_check_branch
          %304 = sbr.rel (%p302) target = $region24
        $region23: #{tpu_custom_call.1} parent=11 // pred_region
          _
        $region24: #{tpu_custom_call.1} parent=11 // pred_fallthru
          _
        // Predicated region
        $region25: #{tpu_custom_call.1} parent=11 // pred_check
          %p305 = pneg %p178
        $region26: #{tpu_custom_call.1} parent=11 // pred_check_branch
          %307 = sbr.rel (%p305) target = $region28
        $region27: #{tpu_custom_call.1} parent=11 // pred_region
          %s308 = smul.u32 2, %s29
          %310 = vsyncadd [#allocation7], 0
          %s311 = smul.addr %s308, 4
          %s312 = smul.addr %s311, 8
          %s313 = scalar_lea.hbm %s5, %s312
          %s314 = sshll.u32 %s313, 4
          %s315 = int_to_ptr.hbm [resolvable:$true] %s314
          %s316 = sshll.u32 [#allocation10], 4
          %s317 = int_to_ptr.vmem [resolvable:$true] %s316
          %322 = dma.hbm_to_vmem [thread:$0]  %s315, 1024, %s317, [#allocation7], 512, 512, 32
        $region28: #{tpu_custom_call.1} parent=11 // pred_fallthru
          _
        // Predicated region
        $region29: #{tpu_custom_call.1} parent=11 // pred_check
          %p323 = pneg %p204
        $region30: #{tpu_custom_call.1} parent=11 // pred_check_branch
          %325 = sbr.rel (%p323) target = $region32
        $region31: #{tpu_custom_call.1} parent=11 // pred_region
          %s326 = smul.u32 2, %s29
          %328 = vsyncadd [#allocation12], 0
          %s329 = smul.addr %s326, 4
          %s330 = smul.addr %s329, 8
          %s331 = scalar_lea.hbm %s6, %s330
          %s332 = sshll.u32 %s331, 4
          %s333 = int_to_ptr.hbm [resolvable:$true] %s332
          %s334 = sshll.u32 [#allocation11], 4
          %s335 = int_to_ptr.vmem [resolvable:$true] %s334
          %340 = dma.hbm_to_vmem [thread:$0]  %s333, 1024, %s335, [#allocation12], 512, 512, 32
        $region32: #{tpu_custom_call.1} parent=11 // pred_fallthru
          _
        // Predicated region
        $region33: #{tpu_custom_call.1} parent=11 // pred_check
          %p341 = pneg %p230
        $region34: #{tpu_custom_call.1} parent=11 // pred_check_branch
          %343 = sbr.rel (%p341) target = $region36
        $region35: #{tpu_custom_call.1} parent=11 // pred_region
          %s344 = smul.u32 2, %s29
          %346 = vsyncadd [#allocation12], 0
          %s347 = smul.addr %s344, 4
          %s348 = smul.addr %s347, 8
          %s349 = scalar_lea.hbm %s7, %s348
          %s350 = sshll.u32 %s349, 4
          %s351 = int_to_ptr.hbm [resolvable:$true] %s350
          %s352 = sshll.u32 [#allocation13], 4
          %s353 = int_to_ptr.vmem [resolvable:$true] %s352
          %358 = dma.hbm_to_vmem [thread:$0]  %s351, 1024, %s353, [#allocation12], 512, 512, 32
        $region36: #{tpu_custom_call.1} parent=11 // pred_fallthru
          _
      $region12: #{tpu_custom_call.1} parent=5 // pred_fallthru
        _
      %p359 = scmp.lt.s32.totalorder %s20, 3
      // Predicated region
      $region37: #{tpu_custom_call.1} parent=5 // pred_check
        %p360 = pneg %p359
      $region38: #{tpu_custom_call.1} parent=5 // pred_check_branch
        %362 = sbr.rel (%p360) target = $region40
      $region39: #{tpu_custom_call.1} parent=5 // pred_region
        // Predicated region
        $region41: #{tpu_custom_call.1} parent=39 // pred_check
          %p363 = pneg %p120
        $region42: #{tpu_custom_call.1} parent=39 // pred_check_branch
          %365 = sbr.rel (%p363) target = $region44
        $region43: #{tpu_custom_call.1} parent=39 // pred_region
          %s366 = sand.u32 %s20, 1
          %s367 = scalar_lea.sflag [#allocation4], %s366
          %s368 = sand.u32 %s110, 1
          %s369 = smul.addr %s368, 128
          %s370 = scalar_lea.vmem [#allocation8], %s369
          %s371 = smul.u32 4, %s28
          %373 = vsyncadd %s367, 0
          %s374 = smul.addr %s371, 8
          %s375 = scalar_lea.hbm %s3, %s374
          %s376 = sshll.u32 %s375, 4
          %s377 = int_to_ptr.hbm [resolvable:$true] %s376
          %s378 = sshll.u32 %s370, 4
          %s379 = int_to_ptr.vmem [resolvable:$true] %s378
          %384 = dma.hbm_to_vmem [thread:$0]  %s377, 2048, %s379, %s367, 1536, 512, 32
        $region44: #{tpu_custom_call.1} parent=39 // pred_fallthru
          _
        // Predicated region
        $region45: #{tpu_custom_call.1} parent=39 // pred_check
          %p385 = pneg %p146
        $region46: #{tpu_custom_call.1} parent=39 // pred_check_branch
          %387 = sbr.rel (%p385) target = $region48
        $region47: #{tpu_custom_call.1} parent=39 // pred_region
          %s388 = sand.u32 %s20, 1
          %s389 = scalar_lea.sflag [#allocation4], %s388
          %s390 = sand.u32 %s136, 1
          %s391 = smul.addr %s390, 4
          %s392 = scalar_lea.vmem [#allocation9], %s391
          %s393 = smul.u32 4, %s28
          %395 = vsyncadd %s389, 0
          %s396 = scalar_lea.hbm %s4, %s393
          %s398 = sshll.u32 %s396, 4
          %s399 = int_to_ptr.hbm [resolvable:$true] %s398
          %s400 = sshll.u32 %s392, 4
          %s401 = int_to_ptr.vmem [resolvable:$true] %s400
          %403 = dma.hbm_to_vmem [thread:$0]  %s399, 64, %s401, %s389
        $region48: #{tpu_custom_call.1} parent=39 // pred_fallthru
          _
      $region40: #{tpu_custom_call.1} parent=5 // pred_fallthru
        _
      %p404 = scmp.le.s32.totalorder 1, %s20
      %p405 = scmp.lt.s32.totalorder %s20, 4
      %p406 = pnand %p404, %p405
      %p407 = pneg %p406
      // Predicated region
      $region49: #{tpu_custom_call.1} parent=5 // pred_check
        _
      $region50: #{tpu_custom_call.1} parent=5 // pred_check_branch
        %409 = sbr.rel (%p406) target = $region52
      $region51: #{tpu_custom_call.1} parent=5 // pred_region
        %s410 = ssub.s32 %s20, 1
        // Predicated region
        $region53: #{tpu_custom_call.1} parent=51 // pred_check
          %p411 = pneg %p58
        $region54: #{tpu_custom_call.1} parent=51 // pred_check_branch
          %413 = sbr.rel (%p411) target = $region56
        $region55: #{tpu_custom_call.1} parent=51 // pred_region
          %415 = dma.done [#allocation4], 256
        $region56: #{tpu_custom_call.1} parent=51 // pred_fallthru
          _
        // Predicated region
        $region57: #{tpu_custom_call.1} parent=51 // pred_check
          %p416 = pneg %p79
        $region58: #{tpu_custom_call.1} parent=51 // pred_check_branch
          %418 = sbr.rel (%p416) target = $region60
        $region59: #{tpu_custom_call.1} parent=51 // pred_region
          %420 = dma.done [#allocation7], 16
        $region60: #{tpu_custom_call.1} parent=51 // pred_fallthru
          _
        %s421 = sand.u32 %s25, 1
        %s422 = scalar_lea.sflag [#allocation4], %s421
        %s423 = sand.u32 %s113, 1
        %s424 = smul.addr %s423, 128
        %s425 = scalar_lea.vmem [#allocation8], %s424
        // Predicated region
        $region61: #{tpu_custom_call.1} parent=51 // pred_check
          %p426 = pneg %p126
        $region62: #{tpu_custom_call.1} parent=51 // pred_check_branch
          %428 = sbr.rel (%p426) target = $region64
        $region63: #{tpu_custom_call.1} parent=51 // pred_region
          %430 = dma.done %s422, 2048
        $region64: #{tpu_custom_call.1} parent=51 // pred_fallthru
          _
        %s431 = sand.u32 %s25, 1
        %s432 = scalar_lea.sflag [#allocation4], %s431
        %s433 = sand.u32 %s139, 1
        %s434 = smul.addr %s433, 4
        %s435 = scalar_lea.vmem [#allocation9], %s434
        // Predicated region
        $region65: #{tpu_custom_call.1} parent=51 // pred_check
          %p436 = pneg %p152
        $region66: #{tpu_custom_call.1} parent=51 // pred_check_branch
          %438 = sbr.rel (%p436) target = $region68
        $region67: #{tpu_custom_call.1} parent=51 // pred_region
          %440 = dma.done %s432, 64
        $region68: #{tpu_custom_call.1} parent=51 // pred_fallthru
          _
        // Predicated region
        $region69: #{tpu_custom_call.1} parent=51 // pred_check
          %p441 = pneg %p178
        $region70: #{tpu_custom_call.1} parent=51 // pred_check_branch
          %443 = sbr.rel (%p441) target = $region72
        $region71: #{tpu_custom_call.1} parent=51 // pred_region
          %445 = dma.done [#allocation7], 1024
        $region72: #{tpu_custom_call.1} parent=51 // pred_fallthru
          _
        // Predicated region
        $region73: #{tpu_custom_call.1} parent=51 // pred_check
          %p446 = pneg %p204
        $region74: #{tpu_custom_call.1} parent=51 // pred_check_branch
          %448 = sbr.rel (%p446) target = $region76
        $region75: #{tpu_custom_call.1} parent=51 // pred_region
          %450 = dma.done [#allocation12], 1024
        $region76: #{tpu_custom_call.1} parent=51 // pred_fallthru
          _
        // Predicated region
        $region77: #{tpu_custom_call.1} parent=51 // pred_check
          %p451 = pneg %p230
        $region78: #{tpu_custom_call.1} parent=51 // pred_check_branch
          %453 = sbr.rel (%p451) target = $region80
        $region79: #{tpu_custom_call.1} parent=51 // pred_region
          %455 = dma.done [#allocation12], 1024
        $region80: #{tpu_custom_call.1} parent=51 // pred_fallthru
          _
        %p456 = pneg %p58
        %p457 = pneg %p55
        %p458 = pneg %p79
        %p459 = pneg %p76
        %p460 = pneg %p100
        %p461 = pneg %p97
        %s462 = sand.u32 %s25, 1
        %s463 = scalar_lea.sflag [#allocation4], %s462
        %s464 = sand.u32 %s113, 1
        %s465 = smul.addr %s464, 128
        %s466 = scalar_lea.vmem [#allocation8], %s465
        %p467 = pneg %p126
        %p468 = pneg %p123
        %s469 = sand.u32 %s25, 1
        %s470 = scalar_lea.sflag [#allocation4], %s469
        %s471 = sand.u32 %s139, 1
        %s472 = smul.addr %s471, 4
        %s473 = scalar_lea.vmem [#allocation9], %s472
        %p474 = pneg %p152
        %p475 = pneg %p149
        %p476 = pneg %p178
        %p477 = pneg %p175
        %p478 = pneg %p204
        %p479 = pneg %p201
        %p480 = pneg %p230
        %p481 = pneg %p227
        %p482 = pneg %p258
        %p483 = pneg %p255
        %s484 = sand.u32 %s245, 1
        %s485 = scalar_lea.sflag [#allocation5], %s484
        %s486 = sand.u32 %s245, 1
        %s487 = smul.addr %s486, 64
        %s488 = scalar_lea.vmem [#allocation14], %s487
        %s489 = smul.u32 2, %s29
        %s490 = smul.u32 4, %s30
        %s491 = smul.u32 4, %s30
        %s492 = smul.u32 2, %s29
        %s493 = smul.u32 2, %s29
        %s494 = smul.u32 2, %s29
        %s495 = smul.u32 2, %s29
        %s496 = smul.u32 4, %s30
        %p497 = scmp.eq.s32.totalorder %s30, 0
        // Predicated region
        $region81: #{tpu_custom_call.1} parent=51 // pred_check
          %p498 = pneg %p497
        $region82: #{tpu_custom_call.1} parent=51 // pred_check_branch
          %500 = sbr.rel (%p498) target = $region84
        $region83: #{tpu_custom_call.1} parent=51 // pred_region
          %v501 = vld [vmem:[#allocation3] sm:$0xff]
          %v502 = vld [vmem:[#allocation3 + $0x8] sm:$0xff]
          %vm503 = vcmask 261120
          %v504 = vsel %vm503, %v501, 0.0
          %505 = vadd.xlane.f32.xlu0 %v504
          %v506 = vpop.xlane.xlu0 %505
          %v507 = vsel %vm503, %v502, 0.0
          %508 = vadd.xlane.f32.xlu0 %v507
          %v509 = vpop.xlane.xlu0 %508
          %v510 = vrcp.pop 32.0
          %v511 = vmul.f32 32.0, %v510
          %v512 = vsub.f32 1.0, %v511
          %v513 = vmul.f32 %v510, %v512
          %v514 = vadd.f32 %v510, %v513
          %vm515 = vweird.f32 %v510
          %v516 = vsel %vm515, %v510, %v514
          %v517 = vmul.f32 %v506, %v516
          %v518 = vmul.f32 %v509, %v516
          %v519 = vsub.f32 %v501, %v517
          %v520 = vsub.f32 %v502, %v518
          %v521 = vmul.f32 %v519, %v519
          %v522 = vmul.f32 %v520, %v520
          %v523 = vsel %vm503, %v521, 0.0
          %524 = vadd.xlane.f32.xlu0 %v523
          %v525 = vpop.xlane.xlu0 %524
          %v526 = vsel %vm503, %v522, 0.0
          %527 = vadd.xlane.f32.xlu0 %v526
          %v528 = vpop.xlane.xlu0 %527
          %v529 = vmul.f32 %v525, %v516
          %v530 = vmul.f32 %v528, %v516
          %v531 = vadd.f32 %v529, 1e-06
          %v532 = vadd.f32 %v530, 1e-06
          %v533 = vrsqrt.pop %v531
          %v534 = vmul.f32 %v533, %v531
          %v535 = vmul.f32 %v534, %v533
          %v536 = vmul.f32 0.5, %v535
          %v537 = vsub.f32 1.5, %v536
          %v538 = vmul.f32 %v533, %v537
          %vm539 = vweird.f32 %v531
          %vm540 = vweird.f32 %v533
          %vm541 = vmor %vm539, %vm540
          %v542 = vsel %vm541, %v533, %v538
          %v543 = vrsqrt.pop %v532
          %v544 = vmul.f32 %v543, %v532
          %v545 = vmul.f32 %v544, %v543
          %v546 = vmul.f32 0.5, %v545
          %v547 = vsub.f32 1.5, %v546
          %v548 = vmul.f32 %v543, %v547
          %vm549 = vweird.f32 %v532
          %vm550 = vweird.f32 %v543
          %vm551 = vmor %vm549, %vm550
          %v552 = vsel %vm551, %v543, %v548
          %v553 = vmul.f32 %v519, %v542
          %v554 = vmul.f32 %v520, %v552
          %v555 = vld [vmem:[#allocation6] sm:$0x1]
          %v557 = vperm.slane %v555, 0
          %v559 = vmul.f32 %v553, %v557
          %v560 = vmul.f32 %v554, %v557
          %v561 = vld [vmem:[%s2] sm:$0x1]
          %v563 = vperm.slane %v561, 0
          %v565 = vadd.f32 %v559, %v563
          %v566 = vadd.f32 %v560, %v563
          %567 = vst.msk [vmem:[#allocation2] sm:$0xff] %vm503, %v565
          %568 = vst.msk [vmem:[#allocation2 + $0x8] sm:$0xff] %vm503, %v566
        $region84: #{tpu_custom_call.1} parent=51 // pred_fallthru
          _
        %v569 = vld [vmem:[#allocation2] sm:$0xff]
        %v570 = vld [vmem:[#allocation2 + $0x8] sm:$0xff]
        %v571 = vld [vmem:[%s425] sm:$0xff]
        %v572 = vld [vmem:[%s425 + $0x8] sm:$0xff]
        %v573 = vld [vmem:[%s425 + $0x10] sm:$0xff]
        %v574 = vld [vmem:[%s425 + $0x18] sm:$0xff]
        %v575 = vld [vmem:[%s425 + $0x20] sm:$0xff]
        %v576 = vld [vmem:[%s425 + $0x28] sm:$0xff]
        %v577 = vld [vmem:[%s425 + $0x30] sm:$0xff]
        %v578 = vld [vmem:[%s425 + $0x38] sm:$0xff]
        %v579 = vld [vmem:[%s425 + $0x40] sm:$0xff]
        %v580 = vld [vmem:[%s425 + $0x48] sm:$0xff]
        %v581 = vld [vmem:[%s425 + $0x50] sm:$0xff]
        %v582 = vld [vmem:[%s425 + $0x58] sm:$0xff]
        %v583 = vld [vmem:[%s425 + $0x60] sm:$0xff]
        %v584 = vld [vmem:[%s425 + $0x68] sm:$0xff]
        %v585 = vld [vmem:[%s425 + $0x70] sm:$0xff]
        %v586 = vld [vmem:[%s425 + $0x78] sm:$0xff]
        %v587 = vld [vmem:[%s435] sm:$0xf]
        %v589 = vperm.slane %v587, 0
        %v590 = vperm.slane %v587, 1
        %v591 = vperm.slane %v587, 2
        %v592 = vperm.slane %v587, 3
        %vm597 = vcmask 261120
        %v599 = vsel %vm597, %v569, 0
        %v602 = vsel %vm597, %v570, 0
        %604 = vmatpush.msra.mxu0 0.0
        %605 = vmatpush.msra.mxu0 0.0
        %606 = vmatpush.msra.mxu0 0.0
        %607 = vmatpush.msra.mxu0 0.0
        %608 = vmatpush.msra.mxu0 0.0
        %609 = vmatpush.msra.mxu0 0.0
        %610 = vmatpush.msra.mxu0 0.0
        %611 = vmatpush.msra.mxu0 0.0
        %612 = vmatpush.msra.mxu0 0.0
        %613 = vmatpush.msra.mxu0 0.0
        %614 = vmatpush.msra.mxu0 0.0
        %615 = vmatpush.msra.mxu0 0.0
        %616 = vmatpush.msra.mxu0 %v583
        %617 = vmatpush.msra.mxu0 %v579
        %618 = vmatpush.msra.mxu0 %v575
        %619 = vmatpush.msra.mxu0 %v571
        %620 = vmatmul.f32.gmra.mxu0 %v599
        %v621 = vpop.f32.mrf.mxu0
        %v622 = vadd.f32 %v589, %v621
        %623 = vmatmul.f32.gmra.mxu0 %v602
        %v624 = vpop.f32.mrf.mxu0
        %v625 = vadd.f32 %v589, %v624
        %626 = vdwg.mxu0
        %627 = vmatpush.msra.mxu0 0.0
        %628 = vmatpush.msra.mxu0 0.0
        %629 = vmatpush.msra.mxu0 0.0
        %630 = vmatpush.msra.mxu0 0.0
        %631 = vmatpush.msra.mxu0 0.0
        %632 = vmatpush.msra.mxu0 0.0
        %633 = vmatpush.msra.mxu0 0.0
        %634 = vmatpush.msra.mxu0 0.0
        %635 = vmatpush.msra.mxu0 0.0
        %636 = vmatpush.msra.mxu0 0.0
        %637 = vmatpush.msra.mxu0 0.0
        %638 = vmatpush.msra.mxu0 0.0
        %639 = vmatpush.msra.mxu0 %v584
        %640 = vmatpush.msra.mxu0 %v580
        %641 = vmatpush.msra.mxu0 %v576
        %642 = vmatpush.msra.mxu0 %v572
        %643 = vmatmul.f32.gmra.mxu0 %v599
        %v644 = vpop.f32.mrf.mxu0
        %v645 = vadd.f32 %v590, %v644
        %646 = vmatmul.f32.gmra.mxu0 %v602
        %v647 = vpop.f32.mrf.mxu0
        %v648 = vadd.f32 %v590, %v647
        %649 = vdwg.mxu0
        %650 = vmatpush.msra.mxu0 0.0
        %651 = vmatpush.msra.mxu0 0.0
        %652 = vmatpush.msra.mxu0 0.0
        %653 = vmatpush.msra.mxu0 0.0
        %654 = vmatpush.msra.mxu0 0.0
        %655 = vmatpush.msra.mxu0 0.0
        %656 = vmatpush.msra.mxu0 0.0
        %657 = vmatpush.msra.mxu0 0.0
        %658 = vmatpush.msra.mxu0 0.0
        %659 = vmatpush.msra.mxu0 0.0
        %660 = vmatpush.msra.mxu0 0.0
        %661 = vmatpush.msra.mxu0 0.0
        %662 = vmatpush.msra.mxu0 %v585
        %663 = vmatpush.msra.mxu0 %v581
        %664 = vmatpush.msra.mxu0 %v577
        %665 = vmatpush.msra.mxu0 %v573
        %666 = vmatmul.f32.gmra.mxu0 %v599
        %v667 = vpop.f32.mrf.mxu0
        %v668 = vadd.f32 %v591, %v667
        %669 = vmatmul.f32.gmra.mxu0 %v602
        %v670 = vpop.f32.mrf.mxu0
        %v671 = vadd.f32 %v591, %v670
        %672 = vdwg.mxu0
        %673 = vmatpush.msra.mxu0 0.0
        %674 = vmatpush.msra.mxu0 0.0
        %675 = vmatpush.msra.mxu0 0.0
        %676 = vmatpush.msra.mxu0 0.0
        %677 = vmatpush.msra.mxu0 0.0
        %678 = vmatpush.msra.mxu0 0.0
        %679 = vmatpush.msra.mxu0 0.0
        %680 = vmatpush.msra.mxu0 0.0
        %681 = vmatpush.msra.mxu0 0.0
        %682 = vmatpush.msra.mxu0 0.0
        %683 = vmatpush.msra.mxu0 0.0
        %684 = vmatpush.msra.mxu0 0.0
        %685 = vmatpush.msra.mxu0 %v586
        %686 = vmatpush.msra.mxu0 %v582
        %687 = vmatpush.msra.mxu0 %v578
        %688 = vmatpush.msra.mxu0 %v574
        %689 = vmatmul.f32.gmra.mxu0 %v599
        %v690 = vpop.f32.mrf.mxu0
        %v691 = vadd.f32 %v592, %v690
        %692 = vmatmul.f32.gmra.mxu0 %v602
        %v693 = vpop.f32.mrf.mxu0
        %v694 = vadd.f32 %v592, %v693
        %695 = vdwg.mxu0
        %p696 = scmp.lt.s32.totalorder %s30, 2
        // Predicated region
        $region85: #{tpu_custom_call.1} parent=51 // pred_check
          %p697 = pneg %p696
        $region86: #{tpu_custom_call.1} parent=51 // pred_check_branch
          %699 = sbr.rel (%p697) target = $region88
        $region87: #{tpu_custom_call.1} parent=51 // pred_region
          %700 = vrot.lane.b32.xlu0 %v622, 4
          %v701 = vpop.permute.xlu0 %700
          %702 = vrot.lane.b32.xlu0 %v625, 4
          %v703 = vpop.permute.xlu0 %702
          %704 = vrot.lane.b32.xlu0 %v645, 4
          %v705 = vpop.permute.xlu0 %704
          %706 = vrot.lane.b32.xlu0 %v648, 4
          %v707 = vpop.permute.xlu0 %706
          %708 = vrot.lane.b32.xlu0 %v668, 4
          %v709 = vpop.permute.xlu0 %708
          %710 = vrot.lane.b32.xlu0 %v671, 4
          %v711 = vpop.permute.xlu0 %710
          %712 = vrot.lane.b32.xlu0 %v691, 4
          %v713 = vpop.permute.xlu0 %712
          %714 = vrot.lane.b32.xlu0 %v694, 4
          %v715 = vpop.permute.xlu0 %714
          %v716 = vlaneseq
          %v717 = vand.u32 %v716, 127
          %vm718 = vcmp.lt.s32.totalorder %v717, 4
          %v719 = vsel %vm718, %v709, %v713
          %v720 = vsel %vm718, %v711, %v715
          %v721 = vsel %vm718, %v705, %v709
          %v722 = vsel %vm718, %v707, %v711
          %v723 = vsel %vm718, %v701, %v705
          %v724 = vsel %vm718, %v703, %v707
          %v725 = vsel %vm718, %v713, %v701
          %v726 = vsel %vm718, %v715, %v703
          %v727 = vld [vmem:[#allocation11] sm:$0xff]
          %v728 = vld [vmem:[#allocation11 + $0x8] sm:$0xff]
          %v729 = vld [vmem:[#allocation11 + $0x10] sm:$0xff]
          %v730 = vld [vmem:[#allocation11 + $0x18] sm:$0xff]
          %v731 = vld [vmem:[#allocation11 + $0x20] sm:$0xff]
          %v732 = vld [vmem:[#allocation11 + $0x28] sm:$0xff]
          %v733 = vld [vmem:[#allocation11 + $0x30] sm:$0xff]
          %v734 = vld [vmem:[#allocation11 + $0x38] sm:$0xff]
          %v735 = vmul.f32 %v725, %v727
          %v736 = vmul.f32 %v723, %v728
          %v737 = vmul.f32 %v721, %v729
          %v738 = vmul.f32 %v719, %v730
          %v739 = vmul.f32 %v726, %v731
          %v740 = vmul.f32 %v724, %v732
          %v741 = vmul.f32 %v722, %v733
          %v742 = vmul.f32 %v720, %v734
          %743 = vrot.lane.b32.xlu0 %v622, 124
          %v744 = vpop.permute.xlu0 %743
          %745 = vrot.lane.b32.xlu0 %v625, 124
          %v746 = vpop.permute.xlu0 %745
          %747 = vrot.lane.b32.xlu0 %v645, 124
          %v748 = vpop.permute.xlu0 %747
          %749 = vrot.lane.b32.xlu0 %v648, 124
          %v750 = vpop.permute.xlu0 %749
          %751 = vrot.lane.b32.xlu0 %v668, 124
          %v752 = vpop.permute.xlu0 %751
          %753 = vrot.lane.b32.xlu0 %v671, 124
          %v754 = vpop.permute.xlu0 %753
          %755 = vrot.lane.b32.xlu0 %v691, 124
          %v756 = vpop.permute.xlu0 %755
          %757 = vrot.lane.b32.xlu0 %v694, 124
          %v758 = vpop.permute.xlu0 %757
          %vm759 = vcmp.lt.s32.totalorder %v717, 124
          %v760 = vsel %vm759, %v752, %v756
          %v761 = vsel %vm759, %v754, %v758
          %v762 = vsel %vm759, %v748, %v752
          %v763 = vsel %vm759, %v750, %v754
          %v764 = vsel %vm759, %v744, %v748
          %v765 = vsel %vm759, %v746, %v750
          %v766 = vsel %vm759, %v756, %v744
          %v767 = vsel %vm759, %v758, %v746
          %v768 = vld [vmem:[#allocation13] sm:$0xff]
          %v769 = vld [vmem:[#allocation13 + $0x8] sm:$0xff]
          %v770 = vld [vmem:[#allocation13 + $0x10] sm:$0xff]
          %v771 = vld [vmem:[#allocation13 + $0x18] sm:$0xff]
          %v772 = vld [vmem:[#allocation13 + $0x20] sm:$0xff]
          %v773 = vld [vmem:[#allocation13 + $0x28] sm:$0xff]
          %v774 = vld [vmem:[#allocation13 + $0x30] sm:$0xff]
          %v775 = vld [vmem:[#allocation13 + $0x38] sm:$0xff]
          %v776 = vmul.f32 %v764, %v768
          %v777 = vmul.f32 %v762, %v769
          %v778 = vmul.f32 %v760, %v770
          %v779 = vmul.f32 %v766, %v771
          %v780 = vmul.f32 %v765, %v772
          %v781 = vmul.f32 %v763, %v773
          %v782 = vmul.f32 %v761, %v774
          %v783 = vmul.f32 %v767, %v775
          %v784 = vadd.f32 %v735, %v776
          %v785 = vadd.f32 %v736, %v777
          %v786 = vadd.f32 %v737, %v778
          %v787 = vadd.f32 %v738, %v779
          %v788 = vadd.f32 %v739, %v780
          %v789 = vadd.f32 %v740, %v781
          %v790 = vadd.f32 %v741, %v782
          %v791 = vadd.f32 %v742, %v783
          %v792 = vld [vmem:[#allocation10] sm:$0xff]
          %v793 = vld [vmem:[#allocation10 + $0x8] sm:$0xff]
          %v794 = vld [vmem:[#allocation10 + $0x10] sm:$0xff]
          %v795 = vld [vmem:[#allocation10 + $0x18] sm:$0xff]
          %v796 = vld [vmem:[#allocation10 + $0x20] sm:$0xff]
          %v797 = vld [vmem:[#allocation10 + $0x28] sm:$0xff]
          %v798 = vld [vmem:[#allocation10 + $0x30] sm:$0xff]
          %v799 = vld [vmem:[#allocation10 + $0x38] sm:$0xff]
          %v800 = vmul.f32 %v622, %v792
          %v801 = vmul.f32 %v645, %v793
          %v802 = vmul.f32 %v668, %v794
          %v803 = vmul.f32 %v691, %v795
          %v804 = vmul.f32 %v625, %v796
          %v805 = vmul.f32 %v648, %v797
          %v806 = vmul.f32 %v671, %v798
          %v807 = vmul.f32 %v694, %v799
          %v808 = vadd.f32 %v800, %v784
          %v809 = vadd.f32 %v801, %v785
          %v810 = vadd.f32 %v802, %v786
          %v811 = vadd.f32 %v803, %v787
          %v812 = vadd.f32 %v804, %v788
          %v813 = vadd.f32 %v805, %v789
          %v814 = vadd.f32 %v806, %v790
          %v815 = vadd.f32 %v807, %v791
          %816 = vst [vmem:[%s488] sm:$0xff] %v808
          %817 = vst [vmem:[%s488 + $0x8] sm:$0xff] %v809
          %818 = vst [vmem:[%s488 + $0x10] sm:$0xff] %v810
          %819 = vst [vmem:[%s488 + $0x18] sm:$0xff] %v811
          %820 = vst [vmem:[%s488 + $0x20] sm:$0xff] %v812
          %821 = vst [vmem:[%s488 + $0x28] sm:$0xff] %v813
          %822 = vst [vmem:[%s488 + $0x30] sm:$0xff] %v814
          %823 = vst [vmem:[%s488 + $0x38] sm:$0xff] %v815
        $region88: #{tpu_custom_call.1} parent=51 // pred_fallthru
          _
        %p824 = scmp.ge.s32.totalorder %s30, 2
        // Predicated region
        $region89: #{tpu_custom_call.1} parent=51 // pred_check
          %p825 = pneg %p824
        $region90: #{tpu_custom_call.1} parent=51 // pred_check_branch
          %827 = sbr.rel (%p825) target = $region92
        $region91: #{tpu_custom_call.1} parent=51 // pred_region
          %828 = vst [vmem:[%s488] sm:$0xff] %v622
          %829 = vst [vmem:[%s488 + $0x8] sm:$0xff] %v645
          %830 = vst [vmem:[%s488 + $0x10] sm:$0xff] %v668
          %831 = vst [vmem:[%s488 + $0x18] sm:$0xff] %v691
          %832 = vst [vmem:[%s488 + $0x20] sm:$0xff] %v625
          %833 = vst [vmem:[%s488 + $0x28] sm:$0xff] %v648
          %834 = vst [vmem:[%s488 + $0x30] sm:$0xff] %v671
          %835 = vst [vmem:[%s488 + $0x38] sm:$0xff] %v694
        $region92: #{tpu_custom_call.1} parent=51 // pred_fallthru
          _
        %s836 = sand.u32 %s245, 1
        %s837 = scalar_lea.sflag [#allocation5], %s836
        %s838 = sand.u32 %s245, 1
        %s839 = smul.addr %s838, 64
        %s840 = scalar_lea.vmem [#allocation14], %s839
        // Predicated region
        $region93: #{tpu_custom_call.1} parent=51 // pred_check
          %p841 = pneg %p255
        $region94: #{tpu_custom_call.1} parent=51 // pred_check_branch
          %843 = sbr.rel (%p841) target = $region96
        $region95: #{tpu_custom_call.1} parent=51 // pred_region
          %s844 = smul.u32 2, %s29
          %s845 = smul.u32 4, %s30
          %847 = vsyncadd %s837, 0
          %s848 = smul.addr %s844, 12
          %s849 = sadd.s32 %s845, %s848
          %s850 = smul.addr %s849, 8
          %s851 = scalar_lea.hbm %s8, %s850
          %s852 = sshll.u32 %s840, 4
          %s853 = int_to_ptr.vmem [resolvable:$true] %s852
          %s854 = sshll.u32 %s851, 4
          %s855 = int_to_ptr.hbm [resolvable:$true] %s854
          %860 = dma.vmem_to_hbm [thread:$0]  %s853, 1024, %s855, %s837, 512, 1536, 32
        $region96: #{tpu_custom_call.1} parent=51 // pred_fallthru
          _
      $region52: #{tpu_custom_call.1} parent=5 // pred_fallthru
        _
      %p861 = scmp.le.s32.totalorder 2, %s20
      // Predicated region
      $region97: #{tpu_custom_call.1} parent=5 // pred_check
        %p862 = pneg %p861
      $region98: #{tpu_custom_call.1} parent=5 // pred_check_branch
        %864 = sbr.rel (%p862) target = $region100
      $region99: #{tpu_custom_call.1} parent=5 // pred_region
        %s865 = ssub.s32 %s20, 2
        // Predicated region
        $region101: #{tpu_custom_call.1} parent=99 // pred_check
          %p866 = pneg %p261
        $region102: #{tpu_custom_call.1} parent=99 // pred_check_branch
          %868 = sbr.rel (%p866) target = $region104
        $region103: #{tpu_custom_call.1} parent=99 // pred_region
          %s869 = sand.u32 %s246, 1
          %s870 = scalar_lea.sflag [#allocation5], %s869
          %s871 = sand.u32 %s246, 1
          %s872 = smul.addr %s871, 64
          %s873 = scalar_lea.vmem [#allocation14], %s872
          %875 = dma.done %s870, 1024
        $region104: #{tpu_custom_call.1} parent=99 // pred_fallthru
          _
      $region100: #{tpu_custom_call.1} parent=5 // pred_fallthru
        _
    $region6: #{tpu_custom_call.1} parent=1 // loop_footer
      %s24 = sadd.s32 1, %s20
    $region7: #{tpu_custom_call.1} parent=1 // loop_footer_branch
      %19 = sbr.rel target = $region3
    $region8: #{tpu_custom_call.1} parent=1 // loop_exit
      _
    %876 = vsyncpa [#allocation4], 1
    %s877 = scalar_lea.sflag [#allocation4], 1
    %878 = vsyncpa %s877, 1
    %879 = vsyncpa [#allocation7], 1
    %880 = vsyncpa [#allocation12], 1
    %881 = vsyncpa [#allocation5], 1
    %s882 = scalar_lea.sflag [#allocation5], 1
    %883 = vsyncpa %s882, 1

</llo_original>
